<compile_context>
chip_gen: v5e
topology: v5e:2x2
jax: 0.10.0
libtpu: 0.0.40
codegen_flags: <defaults>
</compile_context>

<pallas_src>
import functools
import math

import jax
import jax.numpy as jnp
import numpy as np
from jax.experimental import pallas as pl
from jax.experimental.pallas import tpu as pltpu


# ----------------------------------------------------------------------------
# Small helpers
# ----------------------------------------------------------------------------
def _round_up(x, m):
    return (x + m - 1) // m * m


def _pick_cout_tile(cout_p, ktot):
    """Largest 128-multiple Cout tile whose bf16 im2col weight block stays ~<=6 MiB,
    so double-buffered weights remain well inside scoped VMEM (v5e/v6e/v7x)."""
    budget = 6 * 1024 * 1024
    for v in (512, 384, 256, 128):
        if cout_p % v == 0 and ktot * v * 2 <= budget:
            return v
    return 128 if cout_p % 128 == 0 else cout_p


# Exact-erf GELU epilogue (Abramowitz-Stegun 7.1.26, |err| < 1.5e-7) built from exp/mul/add
# only, so it fuses into the kernel epilogue on the EUP/VPU without relying on a lax.erf
# lowering inside Mosaic.
_ERF_P = 0.3275911
_ERF_A = (0.254829592, -0.284496736, 1.421413741, -1.453152027, 1.061405429)


def _erf_poly(z):
    az = jnp.abs(z)
    t = 1.0 / (1.0 + _ERF_P * az)
    a1, a2, a3, a4, a5 = _ERF_A
    poly = t * (a1 + t * (a2 + t * (a3 + t * (a4 + t * a5))))
    e = poly * jnp.exp(-az * az)
    return jnp.where(z >= 0.0, 1.0 - e, e - 1.0)


def _gelu_exact(x):
    return 0.5 * x * (1.0 + _erf_poly(x * 0.7071067811865476))


# ----------------------------------------------------------------------------
# Pallas kernels
# ----------------------------------------------------------------------------
def _matmul_kernel(x_ref, w_ref, b_ref, o_ref, acc_ref, *, scale, activation):
    # x_ref: (tm, tk) bf16   w_ref: (tk, tn) bf16   b_ref: (1|tm, tn) f32
    # o_ref: (tm, tn) f32    acc_ref: (tm, tn) f32 scratch
    @pl.when(pl.program_id(2) == 0)
    def _():
        acc_ref[...] = jnp.zeros_like(acc_ref)

    acc_ref[...] += jnp.dot(x_ref[...], w_ref[...],
                            preferred_element_type=jnp.float32)

    @pl.when(pl.program_id(2) == pl.num_programs(2) - 1)
    def _():
        y = acc_ref[...] + b_ref[...]
        if scale != 1.0:
            y = y * scale
        if activation == "gelu":
            y = _gelu_exact(y)
        o_ref[...] = y.astype(o_ref.dtype)


def _inception_kernel(x_ref, w_ref, b_ref, o_ref, acc_ref, *,
                      L, W, cin, off, taps, scale, activation):
    # x_ref: (1, L + 2*off, cin) bf16  -- flat-time view, zero padded by `off` on both sides
    # w_ref: (n_taps*cin, tcn) bf16    b_ref: (1, tcn) f32
    # o_ref: (1, L, tcn) f32           acc_ref: (L, tcn) f32 scratch
    col = jax.lax.broadcasted_iota(jnp.int32, (L, 1), 0) % W
    masks = {}

    def col_mask(dx):
        if dx not in masks:
            masks[dx] = jnp.logical_and(col + dx >= 0, col + dx < W)
        return masks[dx]

    # Static, fully unrolled tap loop: each 2D-conv tap (dy, dx) is a shift of dy*W + dx in
    # the flattened time axis; row OOB is handled by the zero pad, column OOB by the mask.
    for ti, (dy, dx) in enumerate(taps):
        start = off + dy * W + dx                       # static python int
        xs = x_ref[0, pl.ds(start, L), :]
        if dx != 0:
            xs = jnp.where(col_mask(dx), xs, jnp.zeros_like(xs))
        w_tap = w_ref[pl.ds(ti * cin, cin), :]
        contrib = jnp.dot(xs, w_tap, preferred_element_type=jnp.float32)
        if ti == 0:                                     # taps[0] == (0, 0): direct write
            acc_ref[...] = contrib
        else:
            acc_ref[...] += contrib

    y = (acc_ref[...] + b_ref[...]) * scale
    if activation == "gelu":
        y = _gelu_exact(y)
    o_ref[0] = y.astype(o_ref.dtype)


def _layernorm_kernel(x_ref, w_ref, b_ref, o_ref, *, d, eps):
    # x_ref: (tr, Dp) f32   w_ref/b_ref: (1, Dp) f32
    x = x_ref[...].astype(jnp.float32)
    lane = jax.lax.broadcasted_iota(jnp.int32, x.shape, 1)
    valid = lane < d
    xm = jnp.where(valid, x, 0.0)
    mean = jnp.sum(xm, axis=-1, keepdims=True) * (1.0 / d)
    xc = jnp.where(valid, x - mean, 0.0)
    var = jnp.sum(xc * xc, axis=-1, keepdims=True) * (1.0 / d)
    y = xc * jax.lax.rsqrt(var + eps)
    o_ref[...] = (y * w_ref[...] + b_ref[...]).astype(o_ref.dtype)


# ----------------------------------------------------------------------------
# Kernel wrappers
# ----------------------------------------------------------------------------
def fused_matmul(x, w, bias, *, scale=1.0, activation=None, n_out=None):
    """y = act((x @ w + bias) * scale); x:(M,K), w:(K,N), bias:(1,N) or (M,N)."""
    M, K = x.shape
    Kw, N = w.shape
    assert Kw == K
    if n_out is None:
        n_out = N
    tm = min(256, _round_up(M, 8))
    tk = min(512, _round_up(K, 128))
    tn = min(512, _round_up(N, 128))
    Mp, Kp, Np = _round_up(M, tm), _round_up(K, tk), _round_up(N, tn)

    xp = jnp.pad(x, ((0, Mp - M), (0, Kp - K))).astype(jnp.bfloat16)
    wp = jnp.pad(w, ((0, Kp - K), (0, Np - N))).astype(jnp.bfloat16)
    if bias.ndim == 1:
        bias = bias.reshape(1, -1)
    if bias.shape[0] == 1:
        bp = jnp.pad(bias, ((0, 0), (0, Np - bias.shape[1]))).astype(jnp.float32)
        b_spec = pl.BlockSpec((1, tn), lambda i, j, k: (0, j))
    else:
        assert bias.shape[0] == M
        bp = jnp.pad(bias, ((0, Mp - M), (0, Np - bias.shape[1]))).astype(jnp.float32)
        b_spec = pl.BlockSpec((tm, tn), lambda i, j, k: (i, j))

    kern = functools.partial(_matmul_kernel, scale=float(scale), activation=activation)
    out = pl.pallas_call(
        kern,
        out_shape=jax.ShapeDtypeStruct((Mp, Np), jnp.float32),
        grid=(Mp // tm, Np // tn, Kp // tk),
        in_specs=[
            pl.BlockSpec((tm, tk), lambda i, j, k: (i, k)),
            pl.BlockSpec((tk, tn), lambda i, j, k: (k, j)),
            b_spec,
        ],
        out_specs=pl.BlockSpec((tm, tn), lambda i, j, k: (i, j)),
        scratch_shapes=[pltpu.VMEM((tm, tn), jnp.float32)],
        compiler_params=pltpu.CompilerParams(
            dimension_semantics=("parallel", "parallel", "arbitrary")),
    )(xp, wp, bp)
    return out[:M, :n_out]


def inception_conv(x, period, wcat, bsum, n_kernels, *, scale, activation):
    """InceptionBlockV1 applied to x viewed as a (L//period, period) 2D grid.

    x: (B, L, Cin) f32, channels already lane-padded; returns (B, L, Cout_pad) f32.
    wcat: (n_taps*Cin, Cout_pad) im2col weights, bsum: (Cout_pad,) summed biases.
    """
    B, L, Cin = x.shape
    R = n_kernels - 1
    off = R * period + R
    Ktot, Cout_p = wcat.shape
    n_taps = sum((2 * i + 1) ** 2 for i in range(n_kernels))
    assert Ktot == n_taps * Cin
    taps = []
    for i in range(n_kernels):
        for ky in range(2 * i + 1):
            for kx in range(2 * i + 1):
                taps.append((ky - i, kx - i))

    xp = jnp.pad(x, ((0, 0), (off, off), (0, 0))).astype(jnp.bfloat16)
    wb = wcat.astype(jnp.bfloat16)
    bb = bsum.reshape(1, -1).astype(jnp.float32)
    tcn = _pick_cout_tile(Cout_p, Ktot)
    Lp = L + 2 * off

    kern = functools.partial(_inception_kernel, L=L, W=period, cin=Cin, off=off,
                             taps=tuple(taps), scale=float(scale), activation=activation)
    # TODO(synk): for extremely large d_model*n_taps the (n_taps*Cin, 128) weight block can
    # still exceed the 6 MiB budget; that would need an extra tap-group grid axis.
    return pl.pallas_call(
        kern,
        out_shape=jax.ShapeDtypeStruct((B, L, Cout_p), jnp.float32),
        grid=(B, Cout_p // tcn),
        in_specs=[
            pl.BlockSpec((1, Lp, Cin), lambda b, j: (b, 0, 0)),
            pl.BlockSpec((Ktot, tcn), lambda b, j: (0, j)),
            pl.BlockSpec((1, tcn), lambda b, j: (0, j)),
        ],
        out_specs=pl.BlockSpec((1, L, tcn), lambda b, j: (b, 0, j)),
        scratch_shapes=[pltpu.VMEM((L, tcn), jnp.float32)],
        compiler_params=pltpu.CompilerParams(
            dimension_semantics=("parallel", "parallel")),
    )(xp, wb, bb)


def layer_norm(x, w, b, d_valid, eps=1e-5):
    """LayerNorm over the first d_valid channels of lane-padded x: (B, T, Dp)."""
    B, T, D = x.shape
    rows = B * T
    x2 = x.reshape(rows, D)
    tr = min(512, _round_up(rows, 8))
    Rp = _round_up(rows, tr)
    Dp = _round_up(D, 128)
    x2 = jnp.pad(x2, ((0, Rp - rows), (0, Dp - D)))
    wp = jnp.pad(w.reshape(1, -1).astype(jnp.float32), ((0, 0), (0, Dp - w.shape[0])))
    bp = jnp.pad(b.reshape(1, -1).astype(jnp.float32), ((0, 0), (0, Dp - b.shape[0])))

    kern = functools.partial(_layernorm_kernel, d=int(d_valid), eps=float(eps))
    out = pl.pallas_call(
        kern,
        out_shape=jax.ShapeDtypeStruct((Rp, Dp), jnp.float32),
        grid=(Rp // tr,),
        in_specs=[
            pl.BlockSpec((tr, Dp), lambda i: (i, 0)),
            pl.BlockSpec((1, Dp), lambda i: (0, 0)),
            pl.BlockSpec((1, Dp), lambda i: (0, 0)),
        ],
        out_specs=pl.BlockSpec((tr, Dp), lambda i: (i, 0)),
        compiler_params=pltpu.CompilerParams(dimension_semantics=("parallel",)),
    )(x2, wp, bp)
    return out[:rows, :D].reshape(B, T, D)


# ----------------------------------------------------------------------------
# Model building blocks (glue around the kernels)
# ----------------------------------------------------------------------------
def positional_embedding(T, D):
    position = np.arange(T, dtype=np.float32)[:, None]
    div_term = np.exp(np.arange(0, D, 2, dtype=np.float32) * -(math.log(10000.0) / D))
    pe = np.zeros((T, D), np.float32)
    pe[:, 0::2] = np.sin(position * div_term)
    pe[:, 1::2] = np.cos(position * div_term)
    return jnp.asarray(pe)


def data_embedding(X, token_w, pe):
    """TokenEmbedding: circular Conv1d(F->d_model, k=3, no bias) + positional embedding,
    all fused into one tiled matmul (pe is the per-row bias).
    TODO(synk): dropout in DataEmbedding treated as identity (eval mode) for determinism."""
    B, T, F = X.shape
    x_unf = jnp.concatenate(
        [jnp.roll(X, 1, axis=1), X, jnp.roll(X, -1, axis=1)], axis=-1)  # (B, T, 3F)
    DP = token_w.shape[1]
    pe_rows = jnp.tile(pe, (B, 1))                                       # (B*T, DP)
    y = fused_matmul(x_unf.reshape(B * T, 3 * F), token_w, pe_rows, n_out=DP)
    return y.reshape(B, T, DP)


def cat_inception_weights(w_list, cin_pad, cout_pad):
    """Concatenate per-kernel conv weights (ks,ks,Cin,Cout) into an im2col weight matrix of
    shape (n_taps*cin_pad, cout_pad), zero-padding each tap block to the lane-dense sizes.
    Tap order: kernel i, then ky, then kx (matches _inception_kernel)."""
    parts = []
    for w in w_list:
        ks, _, cin, cout = w.shape
        for ky in range(ks):
            for kx in range(ks):
                blk = jnp.pad(w[ky, kx], ((0, cin_pad - cin), (0, cout_pad - cout)))
                parts.append(blk)
    return jnp.concatenate(parts, axis=0)


def fft_for_period(x, k):
    """Mirrors FFT_for_Period. TODO(synk): the device->host round trip for the top-k
    indices mirrors PyTorch's .detach().cpu().numpy() (data-dependent reshape shapes);
    it prevents end-to-end jit of the forward pass."""
    xf = jnp.fft.rfft(x, axis=1)
    amp = jnp.abs(xf)                               # (B, T//2+1, d_model)
    frequency_list = amp.mean(axis=0).mean(axis=-1)
    frequency_list = frequency_list.at[0].set(0.0)
    _, top_list = jax.lax.top_k(frequency_list, k)
    top_list = np.asarray(jax.device_get(top_list))
    period = x.shape[1] // top_list
    period_weight = amp.mean(axis=-1)[:, top_list]  # (B, k)
    return period, period_weight


def times_block(x, lp, top_k, n_kernels, d_model):
    """x: (B, T, DP) with pad lanes exactly zero."""
    B, T, DP = x.shape
    period_list, period_weight = fft_for_period(x[..., :d_model], top_k)
    res = []
    for i in range(top_k):
        period = int(period_list[i])
        if T % period != 0:
            length = (T // period + 1) * period
            out = jnp.concatenate([x, jnp.zeros((B, length - T, DP), x.dtype)], axis=1)
        else:
            length = T
            out = x
        # Conv2d over the (length//period, period) grid, fused mean/bias/GELU epilogue.
        h = inception_conv(out, period, lp["w0cat"], lp["b0sum"], n_kernels,
                           scale=1.0 / n_kernels, activation="gelu")
        h = inception_conv(h, period, lp["w1cat"], lp["b1sum"], n_kernels,
                           scale=1.0 / n_kernels, activation=None)
        res.append(h[:, :T, :])
    res = jnp.stack(res, axis=-1)                           # (B, T, DP, k)
    pw = jax.nn.softmax(period_weight, axis=1)              # (B, k)
    agg = jnp.sum(res * pw[:, None, None, :], axis=-1)
    return agg + x


def nonstationary_norm(X, missing_mask):
    X = jnp.nan_to_num(X)
    missing_sum = jnp.sum((missing_mask == 1).astype(X.dtype), axis=1, keepdims=True) + 1e-9
    means = jnp.sum(X, axis=1, keepdims=True) / missing_sum
    X_enc = X - means
    X_enc = jnp.where(missing_mask == 0, 0.0, X_enc)
    variance = jnp.sum(X_enc * X_enc, axis=1, keepdims=True) / missing_sum + 1e-9
    stdev = jnp.sqrt(variance)
    X_enc = X_enc / stdev
    return X_enc, means, stdev


def nonstationary_denorm(X, means, stdev):
    return X * stdev + means


def calc_mae(pred, target, mask):
    return jnp.sum(jnp.abs(pred - target) * mask) / (jnp.sum(mask) + 1e-12)


# ----------------------------------------------------------------------------
# Full _TimesNet forward
# ----------------------------------------------------------------------------
def timesnet_forward(inputs, params, cfg, training=True):
    X_ori, missing_mask = inputs["X"], inputs["missing_mask"]
    d_model = cfg["d_model"]

    if cfg["apply_nonstationary_norm"]:
        X, means, stdev = nonstationary_norm(X_ori, missing_mask)
    else:
        X = X_ori

    # enc_embedding (tiled Pallas matmul, pe fused as per-row bias)
    enc_out = data_embedding(X, params["token_w"], params["pe"])   # (B, T, DP)

    # BackboneTimesNet: n_layers x (TimesBlock -> shared LayerNorm)
    for l in range(cfg["n_layers"]):
        enc_out = times_block(enc_out, params["layers"][l], cfg["top_k"],
                              cfg["n_kernels"], d_model)
        enc_out = layer_norm(enc_out, params["ln_w"], params["ln_b"], d_model)

    # output projection (tiled Pallas matmul)
    B, T, DP = enc_out.shape
    F = X_ori.shape[-1]
    dec_out = fused_matmul(enc_out.reshape(B * T, DP), params["proj_w"],
                           params["proj_b"], n_out=F).reshape(B, T, F)

    if cfg["apply_nonstationary_norm"]:
        dec_out = nonstationary_denorm(dec_out, means, stdev)

    imputed_data = missing_mask * X_ori + (1.0 - missing_mask) * dec_out
    results = {"imputed_data": imputed_data}

    if training:
        X_ori_t, indicating_mask, norm_val = (
            inputs["X_ori"], inputs["indicating_mask"], inputs["norm_val"])
        results["loss"] = calc_mae(dec_out * norm_val, X_ori_t * norm_val, indicating_mask)
    return results


# ----------------------------------------------------------------------------
# Deterministic parameter construction (lane-padded layouts built once, up front)
# ----------------------------------------------------------------------------
def init_params(key, T, F, d_model, d_ffn, n_layers, n_kernels):
    DP = _round_up(d_model, 128)
    FP = _round_up(d_ffn, 128)
    keys = iter(jax.random.split(key, 8 + n_layers * 4 * n_kernels))

    def nrm(shape, scale=0.1):
        return scale * jax.random.normal(next(keys), shape, jnp.float32)

    token_w = jnp.pad(nrm((3 * F, d_model)), ((0, 0), (0, DP - d_model)))
    pe = jnp.pad(positional_embedding(T, d_model), ((0, 0), (0, DP - d_model)))
    proj_w = jnp.pad(nrm((d_model, F)), ((0, DP - d_model), (0, 0)))

    params = {
        "token_w": token_w,                      # circular Conv1d weight (im2col layout)
        "pe": pe,
        "ln_w": jnp.ones((d_model,), jnp.float32),
        "ln_b": jnp.zeros((d_model,), jnp.float32),
        "proj_w": proj_w,
        "proj_b": nrm((F,), 0.01),
        "layers": [],
    }
    for _ in range(n_layers):
        w0 = [nrm((2 * i + 1, 2 * i + 1, d_model, d_ffn)) for i in range(n_kernels)]
        b0 = [nrm((d_ffn,), 0.01) for _ in range(n_kernels)]
        w1 = [nrm((2 * i + 1, 2 * i + 1, d_ffn, d_model)) for i in range(n_kernels)]
        b1 = [nrm((d_model,), 0.01) for _ in range(n_kernels)]
        params["layers"].append({
            "w0cat": cat_inception_weights(w0, DP, FP),
            "b0sum": jnp.pad(functools.reduce(jnp.add, b0), (0, FP - d_ffn)),
            "w1cat": cat_inception_weights(w1, FP, DP),
            "b1sum": jnp.pad(functools.reduce(jnp.add, b1), (0, DP - d_model)),
        })
    return params


# ----------------------------------------------------------------------------
# On-device kernel self-test against plain-JAX references (loose bf16 tolerances)
# ----------------------------------------------------------------------------
def _assert_close(got, ref, name, tol=2e-2):
    got = jnp.asarray(got, jnp.float32)
    ref = jnp.asarray(ref, jnp.float32)
    diff = float(jnp.max(jnp.abs(got - ref)))
    scale = float(jnp.max(jnp.abs(ref)))
    assert diff <= tol * max(1.0, scale), f"{name}: max|diff|={diff:.4e}, scale={scale:.3e}"


def _self_test(key):
    k1, k2, k3, k4, k5, k6 = jax.random.split(key, 6)

    # fused_matmul: per-row bias (DataEmbedding path) and (1,N) bias + GELU epilogue.
    M, K, N = 32, 12, 128
    x = jax.random.normal(k1, (M, K), jnp.float32)
    w = 0.1 * jax.random.normal(k2, (K, N), jnp.float32)
    b_row = jax.random.normal(k3, (M, N), jnp.float32)
    _assert_close(fused_matmul(x, w, b_row), x @ w + b_row, "matmul/per-row-bias")
    b1 = 0.1 * jax.random.normal(k3, (1, N), jnp.float32)
    _assert_close(fused_matmul(x, w, b1, activation="gelu"),
                  jax.nn.gelu(x @ w + b1, approximate=False), "matmul/gelu")

    # inception_conv vs lax.conv 2D reference (InceptionBlockV1 mean + bias + GELU).
    B, T, cin, cout, nk, period = 2, 16, 32, 32, 3, 4
    CP, OP = _round_up(cin, 128), _round_up(cout, 128)
    xr = jax.random.normal(k4, (B, T, cin), jnp.float32)
    xpad = jnp.pad(xr, ((0, 0), (0, 0), (0, CP - cin)))
    ws = [0.1 * jax.random.normal(jax.random.fold_in(k5, i),
                                  (2 * i + 1, 2 * i + 1, cin, cout), jnp.float32)
          for i in range(nk)]
    bs = [0.1 * jax.random.normal(jax.random.fold_in(k6, i), (cout,), jnp.float32)
          for i in range(nk)]
    wcat = cat_inception_weights(ws, CP, OP)
    bsum = jnp.pad(functools.reduce(jnp.add, bs), (0, OP - cout))
    got = inception_conv(xpad, period, wcat, bsum, nk,
                         scale=1.0 / nk, activation="gelu")[..., :cout]
    x2d = xr.reshape(B, T // period, period, cin)
    outs = [jax.lax.conv_general_dilated(
                x2d, w2, (1, 1), "SAME",
                dimension_numbers=("NHWC", "HWIO", "NHWC")) + b2
            for w2, b2 in zip(ws, bs)]
    ref = jax.nn.gelu(jnp.mean(jnp.stack(outs, 0), axis=0),
                      approximate=False).reshape(B, T, cout)
    _assert_close(got, ref, "inception_conv")

    # layer_norm vs jnp reference (f32 path, tighter tolerance).
    D = 32
    DPAD = _round_up(D, 128)
    h = jax.random.normal(k1, (B, T, D), jnp.float32)
    hp = jnp.pad(h, ((0, 0), (0, 0), (0, DPAD - D)))
    g = jax.random.normal(k2, (D,), jnp.float32)
    be = jax.random.normal(k3, (D,), jnp.float32)
    got = layer_norm(hp, g, be, D)[..., :D]
    mu = h.mean(-1, keepdims=True)
    var = ((h - mu) ** 2).mean(-1, keepdims=True)
    ref = (h - mu) / jnp.sqrt(var + 1e-5) * g + be
    _assert_close(got, ref, "layer_norm", tol=1e-3)


# ----------------------------------------------------------------------------
if __name__ == "__main__":
    B, T, F = 2, 16, 4
    n_layers, top_k, d_model, d_ffn, n_kernels = 2, 3, 32, 32, 3
    cfg = {
        "n_layers": n_layers,
        "top_k": top_k,
        "n_kernels": n_kernels,
        "d_model": d_model,
        "apply_nonstationary_norm": True,
    }

    key = jax.random.PRNGKey(0)
    k_par, k_x, k_m, k_i, k_n, k_t = jax.random.split(key, 6)

    _self_test(k_t)

    params = init_params(k_par, T, F, d_model, d_ffn, n_layers, n_kernels)

    X_full = jax.random.normal(k_x, (B, T, F), jnp.float32)
    missing_mask = (jax.random.uniform(k_m, (B, T, F)) > 0.2).astype(jnp.float32)
    X_obs = X_full * missing_mask
    indicating_mask = ((jax.random.uniform(k_i, (B, T, F)) > 0.5).astype(jnp.float32)
                       * missing_mask)
    norm_val = jnp.abs(jax.random.normal(k_n, (B, 1, F), jnp.float32)) + 0.5

    inputs = {
        "X": X_obs,
        "missing_mask": missing_mask,
        "X_ori": X_full,
        "indicating_mask": indicating_mask,
        "norm_val": norm_val,
    }

    results = timesnet_forward(inputs, params, cfg, training=True)

    imputed = jax.block_until_ready(results["imputed_data"])
    loss = jax.block_until_ready(results["loss"])

    assert imputed.shape == (B, T, F)
    assert bool(jnp.all(jnp.isfinite(imputed))) and bool(jnp.isfinite(loss))
    print("KERNEL_OK")
</pallas_src>

<mosaic_0001>
module attributes {stable_mosaic.version = 11 : i64} {
  func.func @_matmul_kernel(%arg0: i32, %arg1: i32, %arg2: i32, %arg3: memref<32x128xbf16, #tpu.memory_space<vmem>>, %arg4: memref<128x128xbf16, #tpu.memory_space<vmem>>, %arg5: memref<32x128xf32, #tpu.memory_space<vmem>>, %arg6: memref<32x128xf32, #tpu.memory_space<vmem>>, %arg7: memref<32x128xf32, #tpu.memory_space<vmem>>) attributes {dimension_semantics = [#tpu.dimension_semantics<parallel>, #tpu.dimension_semantics<parallel>, #tpu.dimension_semantics<arbitrary>], iteration_bounds = array<i64: 1, 1, 1>, scalar_prefetch = 0 : i64, scratch_operands = 1 : i64, tpu.core_type = #tpu.core_type<tc>, window_params = [{transform_indices = @transform_0, window_bounds = array<i64: 32, 128>}, {transform_indices = @transform_1, window_bounds = array<i64: 128, 128>}, {transform_indices = @transform_2, window_bounds = array<i64: 32, 128>}, {transform_indices = @transform_3, window_bounds = array<i64: 32, 128>}]} {
    %c0_i32 = arith.constant 0 : i32
    %0 = arith.cmpi eq, %arg2, %c0_i32 : i32
    %1 = arith.extui %0 : i1 to i32
    %c0_i32_0 = arith.constant 0 : i32
    %2 = arith.cmpi ne, %1, %c0_i32_0 : i32
    scf.if %2 {
      %cst_10 = arith.constant 0.000000e+00 : f32
      %12 = vector.broadcast %cst_10 : f32 to vector<32x128xf32>
      %c0_11 = arith.constant 0 : index
      %c0_12 = arith.constant 0 : index
      %13 = vector.load %arg7[%c0_11, %c0_12] : memref<32x128xf32, #tpu.memory_space<vmem>>, vector<32x128xf32>
      tpu.vector_store %arg7[%c0_11, %c0_12], %12 {strides = array<i32>} : memref<32x128xf32, #tpu.memory_space<vmem>>, vector<32x128xf32>,
    } else {
    }
    %c0 = arith.constant 0 : index
    %c0_1 = arith.constant 0 : index
    %3 = vector.load %arg7[%c0, %c0_1] : memref<32x128xf32, #tpu.memory_space<vmem>>, vector<32x128xf32>
    %c0_2 = arith.constant 0 : index
    %c0_3 = arith.constant 0 : index
    %4 = vector.load %arg3[%c0_2, %c0_3] : memref<32x128xbf16, #tpu.memory_space<vmem>>, vector<32x128xbf16>
    %c0_4 = arith.constant 0 : index
    %c0_5 = arith.constant 0 : index
    %5 = vector.load %arg4[%c0_4, %c0_5] : memref<128x128xbf16, #tpu.memory_space<vmem>>, vector<128x128xbf16>
    %cst = arith.constant dense<0.000000e+00> : vector<32x128xf32>
    %6 = tpu.matmul %4, %5, %cst {dimension_numbers = #tpu.dot_dimension_numbers<[1], [0], [0], [1], [0, 0, 1, 1], [], []>} : vector<32x128xbf16>, vector<128x128xbf16>, vector<32x128xf32> -> vector<32x128xf32>
    %7 = arith.addf %3, %6 : vector<32x128xf32>
    %c0_6 = arith.constant 0 : index
    %c0_7 = arith.constant 0 : index
    %8 = vector.load %arg7[%c0_6, %c0_7] : memref<32x128xf32, #tpu.memory_space<vmem>>, vector<32x128xf32>
    tpu.vector_store %arg7[%c0_6, %c0_7], %7 {strides = array<i32>} : memref<32x128xf32, #tpu.memory_space<vmem>>, vector<32x128xf32>,
    %c0_i32_8 = arith.constant 0 : i32
    %9 = arith.cmpi eq, %arg2, %c0_i32_8 : i32
    %10 = arith.extui %9 : i1 to i32
    %c0_i32_9 = arith.constant 0 : i32
    %11 = arith.cmpi ne, %10, %c0_i32_9 : i32
    scf.if %11 {
      %c0_10 = arith.constant 0 : index
      %c0_11 = arith.constant 0 : index
      %12 = vector.load %arg7[%c0_10, %c0_11] : memref<32x128xf32, #tpu.memory_space<vmem>>, vector<32x128xf32>
      %c0_12 = arith.constant 0 : index
      %c0_13 = arith.constant 0 : index
      %13 = vector.load %arg5[%c0_12, %c0_13] : memref<32x128xf32, #tpu.memory_space<vmem>>, vector<32x128xf32>
      %14 = arith.addf %12, %13 : vector<32x128xf32>
      %c0_14 = arith.constant 0 : index
      %c0_15 = arith.constant 0 : index
      %15 = vector.load %arg6[%c0_14, %c0_15] : memref<32x128xf32, #tpu.memory_space<vmem>>, vector<32x128xf32>
      tpu.vector_store %arg6[%c0_14, %c0_15], %14 {strides = array<i32>} : memref<32x128xf32, #tpu.memory_space<vmem>>, vector<32x128xf32>,
    } else {
    }
    return
  }
  func.func @transform_0(%arg0: i32, %arg1: i32, %arg2: i32) -> (i32, i32) {
    %c0_i32 = arith.constant 0 : i32
    return %arg0, %arg2 : i32, i32
  }
  func.func @transform_1(%arg0: i32, %arg1: i32, %arg2: i32) -> (i32, i32) {
    %c0_i32 = arith.constant 0 : i32
    return %arg2, %arg1 : i32, i32
  }
  func.func @transform_2(%arg0: i32, %arg1: i32, %arg2: i32) -> (i32, i32) {
    %c0_i32 = arith.constant 0 : i32
    return %arg0, %arg1 : i32, i32
  }
  func.func @transform_3(%arg0: i32, %arg1: i32, %arg2: i32) -> (i32, i32) {
    %c0_i32 = arith.constant 0 : i32
    return %arg0, %arg1 : i32, i32
  }
}

</mosaic_0001>

<llo_original>
// kernel: tpu_custom_call.1
$region0: #{tpu_custom_call.1}
  #allocation0 [shape = 'u32[]', space=smem, size = 0x4, offset = 0x4, fixed_abs, tag = 'smem constant byte address 0x4 - core index']
  #allocation1 [shape = 'u32[72,128]{1,0:T(1,128)}', space=vmem, size = 0x9000, scoped, tag = 'internal scratch']
  #allocation2 [shape = 'f32[32,128]{1,0:T(8,128)}', space=vmem, size = 0x4000, scoped, tag = 'scratch operand']
  %s0 = inlined_call_operand.hbm [shape: bf16[32,128], index: 0, kind: input, shape index: {}]
  %s1 = inlined_call_operand.hbm [shape: bf16[128,128], index: 1, kind: input, shape index: {}]
  %s2 = inlined_call_operand.hbm [shape: f32[32,128], index: 2, kind: input, shape index: {}]
  %s3 = inlined_call_operand.hbm [shape: f32[32,128], index: 3, kind: output, shape index: {}]
  %s4 = sld [smem:[#allocation0]]
  $region42: #{tpu_custom_call.1} parent=0
    _
  %s6 = ssub.s32 1, %s4
  %s7 = scalar_select 0, %s6, %s4
  $region1: #{tpu_custom_call.1} parent=0
    #allocation3 [shape = 'u8[8192]{0}', space=vmem, size = 0x2000, scoped, tag = 'input window, operand 0, single buffered']
    #allocation4 [shape = 's32[1]{0}', space=sflag, size = 0x4, scoped, tag = 'scoped memory for tpu_custom_call.1']
    #allocation5 [shape = 's32[1]{0}', space=sflag, size = 0x4, scoped, tag = 'scoped memory for tpu_custom_call.1']
    #allocation6 [shape = 'u8[32768]{0}', space=vmem, size = 0x8000, scoped, tag = 'input window, operand 1, single buffered']
    #allocation7 [shape = 's32[1]{0}', space=sflag, size = 0x4, scoped, tag = 'scoped memory for tpu_custom_call.1']
    #allocation8 [shape = 'u8[16384]{0}', space=vmem, size = 0x4000, scoped, tag = 'input window, operand 2, single buffered']
    #allocation9 [shape = 'u8[16384]{0}', space=vmem, size = 0x4000, scoped, tag = 'output window, operand 0, single buffered']
    %8 = vsyncpa [#allocation4], 0
    %9 = vsyncpa [#allocation7], 0
    %10 = vsyncpa [#allocation5], 0
    // Predicated region
    $region2: #{tpu_custom_call.1} parent=1 // pred_check
      _
    $region3: #{tpu_custom_call.1} parent=1 // pred_check_branch
      %12 = sbr.rel (0) target = $region5
    $region4: #{tpu_custom_call.1} parent=1 // pred_region
      %14 = vsyncadd [#allocation4], 0
      %s15 = sshll.u32 %s0, 4
      %s16 = int_to_ptr.hbm [resolvable:$true] %s15
      %s17 = sshll.u32 [#allocation3], 4
      %s18 = int_to_ptr.vmem [resolvable:$true] %s17
      %23 = dma.hbm_to_vmem [thread:$0]  %s16, 256, %s18, [#allocation4], 64, 64, 4
    $region5: #{tpu_custom_call.1} parent=1 // pred_fallthru
      _
    // Predicated region
    $region6: #{tpu_custom_call.1} parent=1 // pred_check
      _
    $region7: #{tpu_custom_call.1} parent=1 // pred_check_branch
      %25 = sbr.rel (0) target = $region9
    $region8: #{tpu_custom_call.1} parent=1 // pred_region
      %27 = vsyncadd [#allocation7], 0
      %s28 = sshll.u32 %s1, 4
      %s29 = int_to_ptr.hbm [resolvable:$true] %s28
      %s30 = sshll.u32 [#allocation6], 4
      %s31 = int_to_ptr.vmem [resolvable:$true] %s30
      %36 = dma.hbm_to_vmem [thread:$0]  %s29, 1024, %s31, [#allocation7], 64, 64, 4
    $region9: #{tpu_custom_call.1} parent=1 // pred_fallthru
      _
    // Predicated region
    $region10: #{tpu_custom_call.1} parent=1 // pred_check
      _
    $region11: #{tpu_custom_call.1} parent=1 // pred_check_branch
      %38 = sbr.rel (0) target = $region13
    $region12: #{tpu_custom_call.1} parent=1 // pred_region
      %40 = vsyncadd [#allocation7], 0
      %s41 = sshll.u32 %s2, 4
      %s42 = int_to_ptr.hbm [resolvable:$true] %s41
      %s43 = sshll.u32 [#allocation8], 4
      %s44 = int_to_ptr.vmem [resolvable:$true] %s43
      %49 = dma.hbm_to_vmem [thread:$0]  %s42, 512, %s44, [#allocation7], 128, 128, 8
    $region13: #{tpu_custom_call.1} parent=1 // pred_fallthru
      _
    // Predicated region
    $region14: #{tpu_custom_call.1} parent=1 // pred_check
      _
    $region15: #{tpu_custom_call.1} parent=1 // pred_check_branch
      %51 = sbr.rel (0) target = $region17
    $region16: #{tpu_custom_call.1} parent=1 // pred_region
      %53 = dma.done [#allocation4], 256
    $region17: #{tpu_custom_call.1} parent=1 // pred_fallthru
      _
    // Predicated region
    $region18: #{tpu_custom_call.1} parent=1 // pred_check
      _
    $region19: #{tpu_custom_call.1} parent=1 // pred_check_branch
      %55 = sbr.rel (0) target = $region21
    $region20: #{tpu_custom_call.1} parent=1 // pred_region
      %57 = dma.done [#allocation7], 1024
    $region21: #{tpu_custom_call.1} parent=1 // pred_fallthru
      _
    // Predicated region
    $region22: #{tpu_custom_call.1} parent=1 // pred_check
      _
    $region23: #{tpu_custom_call.1} parent=1 // pred_check_branch
      %59 = sbr.rel (0) target = $region25
    $region24: #{tpu_custom_call.1} parent=1 // pred_region
      %61 = dma.done [#allocation7], 512
    $region25: #{tpu_custom_call.1} parent=1 // pred_fallthru
      _
    %p62 = scmp.eq.s32.totalorder 0, 0
    // Predicated region
    $region26: #{tpu_custom_call.1} parent=1 // pred_check
      %p63 = pneg %p62
    $region27: #{tpu_custom_call.1} parent=1 // pred_check_branch
      %65 = sbr.rel (%p63) target = $region29
    $region28: #{tpu_custom_call.1} parent=1 // pred_region
      %66 = vst [vmem:[#allocation2] sm:$0xff] 0.0
      %67 = vst [vmem:[#allocation2 + $0x8] sm:$0xff] 0.0
      %68 = vst [vmem:[#allocation2 + $0x10] sm:$0xff] 0.0
      %69 = vst [vmem:[#allocation2 + $0x18] sm:$0xff] 0.0
    $region29: #{tpu_custom_call.1} parent=1 // pred_fallthru
      _
    %v70 = vld [vmem:[#allocation2] sm:$0xff]
    %v71 = vld [vmem:[#allocation2 + $0x8] sm:$0xff]
    %v72 = vld [vmem:[#allocation2 + $0x10] sm:$0xff]
    %v73 = vld [vmem:[#allocation2 + $0x18] sm:$0xff]
    %v74 = vld [vmem:[#allocation3] sm:$0xf]
    %v75 = vld [vmem:[#allocation3 + $0x4] sm:$0xf]
    %v76 = vld [vmem:[#allocation3 + $0x8] sm:$0xf]
    %v77 = vld [vmem:[#allocation3 + $0xc] sm:$0xf]
    %v78 = vld [vmem:[#allocation6] sm:$0xf]
    %v79 = vld [vmem:[#allocation6 + $0x4] sm:$0xf]
    %v80 = vld [vmem:[#allocation6 + $0x8] sm:$0xf]
    %v81 = vld [vmem:[#allocation6 + $0xc] sm:$0xf]
    %v82 = vld [vmem:[#allocation6 + $0x10] sm:$0xf]
    %v83 = vld [vmem:[#allocation6 + $0x14] sm:$0xf]
    %v84 = vld [vmem:[#allocation6 + $0x18] sm:$0xf]
    %v85 = vld [vmem:[#allocation6 + $0x1c] sm:$0xf]
    %v86 = vld [vmem:[#allocation6 + $0x20] sm:$0xf]
    %v87 = vld [vmem:[#allocation6 + $0x24] sm:$0xf]
    %v88 = vld [vmem:[#allocation6 + $0x28] sm:$0xf]
    %v89 = vld [vmem:[#allocation6 + $0x2c] sm:$0xf]
    %v90 = vld [vmem:[#allocation6 + $0x30] sm:$0xf]
    %v91 = vld [vmem:[#allocation6 + $0x34] sm:$0xf]
    %v92 = vld [vmem:[#allocation6 + $0x38] sm:$0xf]
    %v93 = vld [vmem:[#allocation6 + $0x3c] sm:$0xf]
    %v98 = vunpack.c.l.b16 %v74
    %v99 = vunpack.c.l.b16 %v75
    %v100 = vunpack.c.l.b16 %v76
    %v101 = vunpack.c.l.b16 %v77
    %v102 = vpack.c.b16 %v99, %v98
    %v103 = vpack.c.b16 %v101, %v100
    %v122 = vunpack.c.l.b16 %v78
    %v123 = vunpack.c.l.b16 %v79
    %v124 = vunpack.c.l.b16 %v80
    %v125 = vunpack.c.l.b16 %v81
    %v126 = vunpack.c.l.b16 %v82
    %v127 = vunpack.c.l.b16 %v83
    %v128 = vunpack.c.l.b16 %v84
    %v129 = vunpack.c.l.b16 %v85
    %v130 = vunpack.c.l.b16 %v86
    %v131 = vunpack.c.l.b16 %v87
    %v132 = vunpack.c.l.b16 %v88
    %v133 = vunpack.c.l.b16 %v89
    %v134 = vunpack.c.l.b16 %v90
    %v135 = vunpack.c.l.b16 %v91
    %v136 = vunpack.c.l.b16 %v92
    %v137 = vunpack.c.l.b16 %v93
    %v138 = vpack.c.b16 %v123, %v122
    %v139 = vpack.c.b16 %v125, %v124
    %v140 = vpack.c.b16 %v127, %v126
    %v141 = vpack.c.b16 %v129, %v128
    %v142 = vpack.c.b16 %v131, %v130
    %v143 = vpack.c.b16 %v133, %v132
    %v144 = vpack.c.b16 %v135, %v134
    %v145 = vpack.c.b16 %v137, %v136
    %154 = vmatpush.bf16.msra.mxu0 %v145
    %155 = vmatpush.bf16.msra.mxu0 %v144
    %156 = vmatpush.bf16.msra.mxu0 %v143
    %157 = vmatpush.bf16.msra.mxu0 %v142
    %158 = vmatpush.bf16.msra.mxu0 %v141
    %159 = vmatpush.bf16.msra.mxu0 %v140
    %160 = vmatpush.bf16.msra.mxu0 %v139
    %161 = vmatpush.bf16.msra.mxu0 %v138
    %162 = vmatmul.bf16.gmra.mxu0 %v102
    %v163 = vpop.f32.mrf.mxu0
    %v164 = vadd.f32 0.0, %v163
    %v165 = vpop.f32.mrf.mxu0
    %v166 = vadd.f32 0.0, %v165
    %167 = vmatmul.bf16.gmra.mxu0 %v103
    %v168 = vpop.f32.mrf.mxu0
    %v169 = vadd.f32 0.0, %v168
    %v170 = vpop.f32.mrf.mxu0
    %v171 = vadd.f32 0.0, %v170
    %172 = vdwg.mxu0
    %v173 = vadd.f32 %v70, %v164
    %v174 = vadd.f32 %v71, %v166
    %v175 = vadd.f32 %v72, %v169
    %v176 = vadd.f32 %v73, %v171
    %177 = vst [vmem:[#allocation2] sm:$0xff] %v173
    %178 = vst [vmem:[#allocation2 + $0x8] sm:$0xff] %v174
    %179 = vst [vmem:[#allocation2 + $0x10] sm:$0xff] %v175
    %180 = vst [vmem:[#allocation2 + $0x18] sm:$0xff] %v176
    // Predicated region
    $region30: #{tpu_custom_call.1} parent=1 // pred_check
      %p181 = pneg %p62
    $region31: #{tpu_custom_call.1} parent=1 // pred_check_branch
      %183 = sbr.rel (%p181) target = $region33
    $region32: #{tpu_custom_call.1} parent=1 // pred_region
      %v184 = vld [vmem:[#allocation2] sm:$0xff]
      %v185 = vld [vmem:[#allocation2 + $0x8] sm:$0xff]
      %v186 = vld [vmem:[#allocation2 + $0x10] sm:$0xff]
      %v187 = vld [vmem:[#allocation2 + $0x18] sm:$0xff]
      %v188 = vld [vmem:[#allocation8] sm:$0xff]
      %v189 = vld [vmem:[#allocation8 + $0x8] sm:$0xff]
      %v190 = vld [vmem:[#allocation8 + $0x10] sm:$0xff]
      %v191 = vld [vmem:[#allocation8 + $0x18] sm:$0xff]
      %v192 = vadd.f32 %v184, %v188
      %v193 = vadd.f32 %v185, %v189
      %v194 = vadd.f32 %v186, %v190
      %v195 = vadd.f32 %v187, %v191
      %196 = vst [vmem:[#allocation9] sm:$0xff] %v192
      %197 = vst [vmem:[#allocation9 + $0x8] sm:$0xff] %v193
      %198 = vst [vmem:[#allocation9 + $0x10] sm:$0xff] %v194
      %199 = vst [vmem:[#allocation9 + $0x18] sm:$0xff] %v195
    $region33: #{tpu_custom_call.1} parent=1 // pred_fallthru
      _
    // Predicated region
    $region34: #{tpu_custom_call.1} parent=1 // pred_check
      _
    $region35: #{tpu_custom_call.1} parent=1 // pred_check_branch
      %201 = sbr.rel (0) target = $region37
    $region36: #{tpu_custom_call.1} parent=1 // pred_region
      %203 = vsyncadd [#allocation5], 0
      %s204 = sshll.u32 [#allocation9], 4
      %s205 = int_to_ptr.vmem [resolvable:$true] %s204
      %s206 = sshll.u32 %s3, 4
      %s207 = int_to_ptr.hbm [resolvable:$true] %s206
      %212 = dma.vmem_to_hbm [thread:$0]  %s205, 512, %s207, [#allocation5], 128, 128, 8
    $region37: #{tpu_custom_call.1} parent=1 // pred_fallthru
      _
    // Predicated region
    $region38: #{tpu_custom_call.1} parent=1 // pred_check
      _
    $region39: #{tpu_custom_call.1} parent=1 // pred_check_branch
      %214 = sbr.rel (0) target = $region41
    $region40: #{tpu_custom_call.1} parent=1 // pred_region
      %216 = dma.done [#allocation5], 512
    $region41: #{tpu_custom_call.1} parent=1 // pred_fallthru
      _
    %217 = vsyncpa [#allocation4], 1
    %218 = vsyncpa [#allocation7], 1
    %219 = vsyncpa [#allocation5], 1

</llo_original>
